<compile_context>
chip_gen: v7x
topology: tpu7x:2x2x1
jax: 0.10.0
libtpu: 0.0.40
codegen_flags: <defaults>
</compile_context>

<pallas_src>
import jax
import jax.numpy as jnp
from jax.experimental import pallas as pl
from jax.experimental.pallas import tpu as pltpu


def _outconv_se_kernel(x_ref, w_ref, b_ref, o_ref):
    # x_ref: (Cin, TL)   channel-major, lane-dense fused batch*spatial axis
    # w_ref: (Cout, Cin) 1x1 conv weight (PyTorch (Cout, Cin, 1, 1) squeezed)
    # b_ref: (Cout, 1)   bias, broadcast along the lane (TL) axis
    # o_ref: (Cout, TL)
    y = jnp.dot(w_ref[...], x_ref[...], preferred_element_type=jnp.float32)
    o_ref[...] = (y + b_ref[...]).astype(o_ref.dtype)


def _pick_lane_tile(L, max_tile=32768):
    """Full slab when it fits; otherwise the largest multiple-of-128 divisor <= max_tile.

    Keeps (in + out) double-buffers comfortably inside v7x's 64 MiB VMEM while keeping
    DMAs large enough (thousands of lanes) for the ~85%-of-roofline regime.
    """
    if L <= max_tile:
        return L
    t = (max_tile // 128) * 128
    while t >= 128:
        if L % t == 0:
            return t
        t -= 128
    return L  # fallback: ragged L, take the whole thing in one step


def outconv_se_pallas(x_nchw, weight_oc, bias_o):
    """x_nchw: (N, Cin, H, W) f32; weight_oc: (Cout, Cin); bias_o: (Cout,).
    Returns (N, Cout, H, W) f32, matching nn.Conv2d(Cin, Cout, kernel_size=1)."""
    N, Cin, H, W = x_nchw.shape
    Cout = weight_oc.shape[0]
    HW = H * W
    L = N * HW

    # Pre-arrange once in the wrapper: (Cin, N*HW). This tiny transpose is layout
    # plumbing that buys one fused matmul + one wide lane-dense store in the kernel.
    x2 = jnp.transpose(x_nchw.reshape(N, Cin, HW).astype(jnp.float32),
                       (1, 0, 2)).reshape(Cin, L)
    w = weight_oc.astype(jnp.float32)                 # (Cout, Cin)
    b2 = bias_o.reshape(Cout, 1).astype(jnp.float32)  # (Cout, 1)

    tl = _pick_lane_tile(L)
    grid = (L // tl,)

    # Only shard across TensorCores (v7x) when each step moves enough to amortize
    # the fixed per-step pipeline cost; tiny steps stay on one core.
    per_step_bytes = (Cin + Cout) * tl * 4
    sem = ("parallel",) if per_step_bytes >= (512 << 10) else ("arbitrary",)

    out = pl.pallas_call(
        _outconv_se_kernel,
        out_shape=jax.ShapeDtypeStruct((Cout, L), jnp.float32),
        grid_spec=pltpu.PrefetchScalarGridSpec(
            num_scalar_prefetch=0,
            grid=grid,
            in_specs=[
                pl.BlockSpec((Cin, tl), lambda i: (0, i)),     # lane-chunked activations
                pl.BlockSpec((Cout, Cin), lambda i: (0, 0)),   # weight: constant block
                pl.BlockSpec((Cout, 1), lambda i: (0, 0)),     # bias:   constant block
            ],
            out_specs=pl.BlockSpec((Cout, tl), lambda i: (0, i)),
        ),
        compiler_params=pltpu.CompilerParams(dimension_semantics=sem),
    )(x2, w, b2)

    # (Cout, N*HW) -> (N, Cout, H, W)
    return jnp.transpose(out.reshape(Cout, N, HW), (1, 0, 2)).reshape(N, Cout, H, W)


def outconv_se_reference(x_nchw, weight_oc, bias_o):
    """Pure-JAX reference: 1x1 conv with bias (PyTorch Conv2d semantics)."""
    y = jnp.einsum('oc,nchw->nohw', weight_oc, x_nchw)
    return y + bias_o[None, :, None, None]


if __name__ == "__main__":
    # OutConv_SE(in_channels=4, out_channels=8), input NCHW = (2, 4, 16, 16)
    N, Cin, Cout, H, W = 2, 4, 8, 16, 16

    key = jax.random.PRNGKey(0)
    kx, kw, kb = jax.random.split(key, 3)

    x = jax.random.normal(kx, (N, Cin, H, W), dtype=jnp.float32)
    # PyTorch weight is (Cout, Cin, 1, 1); we carry it squeezed as (Cout, Cin).
    w = 0.1 * jax.random.normal(kw, (Cout, Cin), dtype=jnp.float32)
    b = 0.1 * jax.random.normal(kb, (Cout,), dtype=jnp.float32)

    out = jax.block_until_ready(outconv_se_pallas(x, w, b))
    ref = jax.block_until_ready(outconv_se_reference(x, w, b))

    assert out.shape == (N, Cout, H, W)
    assert jnp.allclose(out, ref, atol=1e-5, rtol=1e-5), float(
        jnp.max(jnp.abs(out - ref)))

    print("KERNEL_OK")
</pallas_src>

<mosaic_0001>
module attributes {stable_mosaic.version = 11 : i64} {
  func.func @_outconv_se_kernel(%arg0: i32, %arg1: memref<4x512xf32, #tpu.memory_space<vmem>>, %arg2: memref<8x4xf32, #tpu.memory_space<vmem>>, %arg3: memref<8x1xf32, #tpu.memory_space<vmem>>, %arg4: memref<8x512xf32, #tpu.memory_space<vmem>>) attributes {dimension_semantics = [#tpu.dimension_semantics<arbitrary>], iteration_bounds = array<i64: 1>, scalar_prefetch = 0 : i64, scratch_operands = 0 : i64, tpu.core_type = #tpu.core_type<tc>, window_params = [{transform_indices = @transform_0, window_bounds = array<i64: 4, 512>}, {pipeline_mode = #tpu.pipeline_mode<synchronous>, transform_indices = @transform_1, window_bounds = array<i64: 8, 4>}, {pipeline_mode = #tpu.pipeline_mode<synchronous>, transform_indices = @transform_2, window_bounds = array<i64: 8, 1>}, {transform_indices = @transform_3, window_bounds = array<i64: 8, 512>}]} {
    %c0 = arith.constant 0 : index
    %c0_0 = arith.constant 0 : index
    %0 = vector.load %arg2[%c0, %c0_0] : memref<8x4xf32, #tpu.memory_space<vmem>>, vector<8x4xf32>
    %c0_1 = arith.constant 0 : index
    %c0_2 = arith.constant 0 : index
    %1 = vector.load %arg1[%c0_1, %c0_2] : memref<4x512xf32, #tpu.memory_space<vmem>>, vector<4x512xf32>
    %cst = arith.constant dense<0.000000e+00> : vector<8x512xf32>
    %2 = tpu.matmul %0, %1, %cst {dimension_numbers = #tpu.dot_dimension_numbers<[1], [0], [0], [1], [0, 0, 1, 1], [], []>} : vector<8x4xf32>, vector<4x512xf32>, vector<8x512xf32> -> vector<8x512xf32>
    %c0_3 = arith.constant 0 : index
    %c0_4 = arith.constant 0 : index
    %3 = vector.load %arg3[%c0_3, %c0_4] : memref<8x1xf32, #tpu.memory_space<vmem>>, vector<8x1xf32>
    %4 = vector.broadcast %3 : vector<8x1xf32> to vector<8x512xf32>
    %5 = arith.addf %2, %4 : vector<8x512xf32>
    %c0_5 = arith.constant 0 : index
    %c0_6 = arith.constant 0 : index
    %6 = vector.load %arg4[%c0_5, %c0_6] : memref<8x512xf32, #tpu.memory_space<vmem>>, vector<8x512xf32>
    tpu.vector_store %arg4[%c0_5, %c0_6], %5 {strides = array<i32>} : memref<8x512xf32, #tpu.memory_space<vmem>>, vector<8x512xf32>,
    return
  }
  func.func @transform_0(%arg0: i32) -> (i32, i32) {
    %c0_i32 = arith.constant 0 : i32
    %c0_i32_0 = arith.constant 0 : i32
    return %c0_i32, %arg0 : i32, i32
  }
  func.func @transform_1(%arg0: i32) -> (i32, i32) {
    %c0_i32 = arith.constant 0 : i32
    %c0_i32_0 = arith.constant 0 : i32
    %c0_i32_1 = arith.constant 0 : i32
    return %c0_i32, %c0_i32_0 : i32, i32
  }
  func.func @transform_2(%arg0: i32) -> (i32, i32) {
    %c0_i32 = arith.constant 0 : i32
    %c0_i32_0 = arith.constant 0 : i32
    %c0_i32_1 = arith.constant 0 : i32
    return %c0_i32, %c0_i32_0 : i32, i32
  }
  func.func @transform_3(%arg0: i32) -> (i32, i32) {
    %c0_i32 = arith.constant 0 : i32
    %c0_i32_0 = arith.constant 0 : i32
    return %c0_i32, %arg0 : i32, i32
  }
}

</mosaic_0001>

<llo_original>
// kernel: tpu_custom_call.1
$region0: #{tpu_custom_call.1}
  #allocation0 [shape = 'u32[]', space=smem, size = 0x4, offset = 0x4, fixed_abs, tag = 'smem constant byte address 0x4 - core index']
  #allocation1 [shape = 'u32[144,128]{1,0:T(1,128)}', space=vmem, size = 0x12000, scoped, tag = 'internal scratch']
  %s0 = inlined_call_operand.vmem [shape: f32[4,512], index: 0, kind: input, shape index: {}]
  %s1 = inlined_call_operand.vmem [shape: f32[8,4], index: 1, kind: input, shape index: {}]
  %s2 = inlined_call_operand.vmem [shape: f32[8,1], index: 2, kind: input, shape index: {}]
  %s3 = inlined_call_operand.hbm [shape: f32[8,512], index: 3, kind: output, shape index: {}]
  %s4 = sld [smem:[#allocation0]]
  $region22: #{tpu_custom_call.1} parent=0
    _
  %s6 = ssub.s32 1, %s4
  %s7 = scalar_select 0, %s6, %s4
  $region1: #{tpu_custom_call.1} parent=0
    #allocation2 [shape = 'u8[16384]{0}', space=vmem, size = 0x4000, scoped, tag = 'output window, operand 0, single buffered']
    #allocation3 [shape = 's32[1]{0}', space=sflag, size = 0x4, scoped, tag = 'scoped memory for tpu_custom_call.1']
    %8 = vsyncpa [#allocation3], 0
    // Predicated region
    $region2: #{tpu_custom_call.1} parent=1 // pred_check
      _
    $region3: #{tpu_custom_call.1} parent=1 // pred_check_branch
      %10 = sbr.rel (0) target = $region5
    $region4: #{tpu_custom_call.1} parent=1 // pred_region
      _
    $region5: #{tpu_custom_call.1} parent=1 // pred_fallthru
      _
    // Predicated region
    $region6: #{tpu_custom_call.1} parent=1 // pred_check
      _
    $region7: #{tpu_custom_call.1} parent=1 // pred_check_branch
      %12 = sbr.rel (0) target = $region9
    $region8: #{tpu_custom_call.1} parent=1 // pred_region
      _
    $region9: #{tpu_custom_call.1} parent=1 // pred_fallthru
      _
    // Predicated region
    $region10: #{tpu_custom_call.1} parent=1 // pred_check
      _
    $region11: #{tpu_custom_call.1} parent=1 // pred_check_branch
      %14 = sbr.rel (0) target = $region13
    $region12: #{tpu_custom_call.1} parent=1 // pred_region
      _
    $region13: #{tpu_custom_call.1} parent=1 // pred_fallthru
      _
    %v15 = vld [vmem:[%s1] sm:$0xff]
    %v16 = vld [vmem:[%s0] sm:$0xff]
    %v17 = vld [vmem:[%s0 + $0x8] sm:$0xff]
    %v18 = vld [vmem:[%s2] sm:$0xff]
    %20 = vset.pattern.permute.xlu0 0
    %21 = vperm.xlu0 %20, %v18
    %v22 = vpop.permute.xlu0 %21
    %v26 = vcombine.high %v16, %v16
    %v27 = vcombine.high %v17, %v17
    %vm28 = vcmask 31744
    %v30 = vsel %vm28, %v15, 0
    %vm32 = vcmask 1043456
    %v33 = vsel %vm32, %v16, 0
    %v35 = vsel %vm32, %v26, 0
    %v37 = vsel %vm32, %v17, 0
    %v39 = vsel %vm32, %v27, 0
    %41 = vmatprep.subr.mxu0 %v35
    %42 = vmatpush1.msra.mxu0 %v33
    %43 = vmatprep.subr.mxu0 0.0
    %44 = vmatpush1.msra.mxu0 0.0
    %45 = vmatprep.subr.mxu0 0.0
    %46 = vmatpush1.msra.mxu0 0.0
    %47 = vmatprep.subr.mxu0 0.0
    %48 = vmatpush1.msra.mxu0 0.0
    %49 = vmatprep.subr.mxu0 0.0
    %50 = vmatpush1.msra.mxu0 0.0
    %51 = vmatprep.subr.mxu0 0.0
    %52 = vmatpush1.msra.mxu0 0.0
    %53 = vmatprep.subr.mxu0 0.0
    %54 = vmatpush1.msra.mxu0 0.0
    %55 = vmatprep.subr.mxu0 0.0
    %56 = vmatpush1.msra.mxu0 0.0
    %57 = vmatprep.subr.mxu0 0.0
    %58 = vmatpush1.msra.mxu0 0.0
    %59 = vmatprep.subr.mxu0 0.0
    %60 = vmatpush1.msra.mxu0 0.0
    %61 = vmatprep.subr.mxu0 0.0
    %62 = vmatpush1.msra.mxu0 0.0
    %63 = vmatprep.subr.mxu0 0.0
    %64 = vmatpush1.msra.mxu0 0.0
    %65 = vmatprep.subr.mxu0 0.0
    %66 = vmatpush1.msra.mxu0 0.0
    %67 = vmatprep.subr.mxu0 0.0
    %68 = vmatpush1.msra.mxu0 0.0
    %69 = vmatprep.subr.mxu0 0.0
    %70 = vmatpush1.msra.mxu0 0.0
    %71 = vmatprep.subr.mxu0 0.0
    %72 = vmatpush1.msra.mxu0 0.0
    %73 = vmatprep.subr.mxu0 0.0
    %74 = vmatpush1.msra.mxu0 0.0
    %75 = vmatprep.subr.mxu0 0.0
    %76 = vmatpush1.msra.mxu0 0.0
    %77 = vmatprep.subr.mxu0 0.0
    %78 = vmatpush1.msra.mxu0 0.0
    %79 = vmatprep.subr.mxu0 0.0
    %80 = vmatpush1.msra.mxu0 0.0
    %81 = vmatprep.subr.mxu0 0.0
    %82 = vmatpush1.msra.mxu0 0.0
    %83 = vmatprep.subr.mxu0 0.0
    %84 = vmatpush1.msra.mxu0 0.0
    %85 = vmatprep.subr.mxu0 0.0
    %86 = vmatpush1.msra.mxu0 0.0
    %87 = vmatprep.subr.mxu0 0.0
    %88 = vmatpush1.msra.mxu0 0.0
    %89 = vmatprep.subr.mxu0 0.0
    %90 = vmatpush1.msra.mxu0 0.0
    %91 = vmatprep.subr.mxu0 0.0
    %92 = vmatpush1.msra.mxu0 0.0
    %93 = vmatprep.subr.mxu0 0.0
    %94 = vmatpush1.msra.mxu0 0.0
    %95 = vmatprep.subr.mxu0 0.0
    %96 = vmatpush1.msra.mxu0 0.0
    %97 = vmatprep.subr.mxu0 0.0
    %98 = vmatpush1.msra.mxu0 0.0
    %99 = vmatprep.subr.mxu0 0.0
    %100 = vmatpush1.msra.mxu0 0.0
    %101 = vmatprep.subr.mxu0 0.0
    %102 = vmatpush1.msra.mxu0 0.0
    %103 = vmatprep.subr.mxu0 0.0
    %104 = vmatpush1.msra.mxu0 0.0
    %105 = vmatprep.mubr.f32.mxu0 0.0
    %106 = vmatmul.mubr.f32.gmra.mrb[0].mxu0 %v30
    %v107 = vpop.f32.mrb[0].mxu0
    %v108 = vadd.f32 %v22, %v107
    %v109 = vpop.f32.mrb[0].mxu0
    %v110 = vadd.f32 %v22, %v109
    %111 = vdwg.mxu0
    %112 = vmatprep.subr.mxu0 %v39
    %113 = vmatpush1.msra.mxu0 %v37
    %114 = vmatprep.subr.mxu0 0.0
    %115 = vmatpush1.msra.mxu0 0.0
    %116 = vmatprep.subr.mxu0 0.0
    %117 = vmatpush1.msra.mxu0 0.0
    %118 = vmatprep.subr.mxu0 0.0
    %119 = vmatpush1.msra.mxu0 0.0
    %120 = vmatprep.subr.mxu0 0.0
    %121 = vmatpush1.msra.mxu0 0.0
    %122 = vmatprep.subr.mxu0 0.0
    %123 = vmatpush1.msra.mxu0 0.0
    %124 = vmatprep.subr.mxu0 0.0
    %125 = vmatpush1.msra.mxu0 0.0
    %126 = vmatprep.subr.mxu0 0.0
    %127 = vmatpush1.msra.mxu0 0.0
    %128 = vmatprep.subr.mxu0 0.0
    %129 = vmatpush1.msra.mxu0 0.0
    %130 = vmatprep.subr.mxu0 0.0
    %131 = vmatpush1.msra.mxu0 0.0
    %132 = vmatprep.subr.mxu0 0.0
    %133 = vmatpush1.msra.mxu0 0.0
    %134 = vmatprep.subr.mxu0 0.0
    %135 = vmatpush1.msra.mxu0 0.0
    %136 = vmatprep.subr.mxu0 0.0
    %137 = vmatpush1.msra.mxu0 0.0
    %138 = vmatprep.subr.mxu0 0.0
    %139 = vmatpush1.msra.mxu0 0.0
    %140 = vmatprep.subr.mxu0 0.0
    %141 = vmatpush1.msra.mxu0 0.0
    %142 = vmatprep.subr.mxu0 0.0
    %143 = vmatpush1.msra.mxu0 0.0
    %144 = vmatprep.subr.mxu0 0.0
    %145 = vmatpush1.msra.mxu0 0.0
    %146 = vmatprep.subr.mxu0 0.0
    %147 = vmatpush1.msra.mxu0 0.0
    %148 = vmatprep.subr.mxu0 0.0
    %149 = vmatpush1.msra.mxu0 0.0
    %150 = vmatprep.subr.mxu0 0.0
    %151 = vmatpush1.msra.mxu0 0.0
    %152 = vmatprep.subr.mxu0 0.0
    %153 = vmatpush1.msra.mxu0 0.0
    %154 = vmatprep.subr.mxu0 0.0
    %155 = vmatpush1.msra.mxu0 0.0
    %156 = vmatprep.subr.mxu0 0.0
    %157 = vmatpush1.msra.mxu0 0.0
    %158 = vmatprep.subr.mxu0 0.0
    %159 = vmatpush1.msra.mxu0 0.0
    %160 = vmatprep.subr.mxu0 0.0
    %161 = vmatpush1.msra.mxu0 0.0
    %162 = vmatprep.subr.mxu0 0.0
    %163 = vmatpush1.msra.mxu0 0.0
    %164 = vmatprep.subr.mxu0 0.0
    %165 = vmatpush1.msra.mxu0 0.0
    %166 = vmatprep.subr.mxu0 0.0
    %167 = vmatpush1.msra.mxu0 0.0
    %168 = vmatprep.subr.mxu0 0.0
    %169 = vmatpush1.msra.mxu0 0.0
    %170 = vmatprep.subr.mxu0 0.0
    %171 = vmatpush1.msra.mxu0 0.0
    %172 = vmatprep.subr.mxu0 0.0
    %173 = vmatpush1.msra.mxu0 0.0
    %174 = vmatprep.subr.mxu0 0.0
    %175 = vmatpush1.msra.mxu0 0.0
    %176 = vmatprep.mubr.f32.mxu0 0.0
    %177 = vmatmul.mubr.f32.gmra.mrb[0].mxu0 %v30
    %v178 = vpop.f32.mrb[0].mxu0
    %v179 = vadd.f32 %v22, %v178
    %v180 = vpop.f32.mrb[0].mxu0
    %v181 = vadd.f32 %v22, %v180
    %182 = vdwg.mxu0
    %183 = vst [vmem:[#allocation2] sm:$0xff] %v108
    %184 = vst [vmem:[#allocation2 + $0x8] sm:$0xff] %v110
    %185 = vst [vmem:[#allocation2 + $0x10] sm:$0xff] %v179
    %186 = vst [vmem:[#allocation2 + $0x18] sm:$0xff] %v181
    // Predicated region
    $region14: #{tpu_custom_call.1} parent=1 // pred_check
      _
    $region15: #{tpu_custom_call.1} parent=1 // pred_check_branch
      %188 = sbr.rel (0) target = $region17
    $region16: #{tpu_custom_call.1} parent=1 // pred_region
      %s190 = ssub.s32 512, 512
      %191 = vsyncadd [#allocation3], %s190
      %s193 = sshll.u32 [#allocation2], 4
      %s194 = int_to_ptr.vmem [resolvable:$true] %s193
      %196 = dma.vmem_to_hbm [thread:$0]  %s194, 512, %s3, [#allocation3]
    $region17: #{tpu_custom_call.1} parent=1 // pred_fallthru
      _
    // Predicated region
    $region18: #{tpu_custom_call.1} parent=1 // pred_check
      _
    $region19: #{tpu_custom_call.1} parent=1 // pred_check_branch
      %198 = sbr.rel (0) target = $region21
    $region20: #{tpu_custom_call.1} parent=1 // pred_region
      %199 = dma.done [#allocation3], 512
    $region21: #{tpu_custom_call.1} parent=1 // pred_fallthru
      _
    %200 = vsyncpa [#allocation3], 1

</llo_original>
